<compile_context>
chip_gen: v5e
topology: v5e:2x2
jax: 0.10.0
libtpu: 0.0.40
codegen_flags: <defaults>
</compile_context>

<pallas_src>
import functools
import math

import jax
import jax.numpy as jnp
from jax.experimental import pallas as pl
from jax.experimental.pallas import tpu as pltpu

LANE = 128
SUBLANE = 8
NEG_LARGE = -1e30  # mask value for padded action columns


def _round_up(n, m):
    return ((n + m - 1) // m) * m


def actor_kernel(x_ref, u_ref, w_ref, b_ref, out_ref, *, action_size):
    """One batch tile. x/u: (TB, D) f32; w: (3, D, D) bf16; b: (8, D) f32."""
    x = x_ref[...]                                   # (TB, D) f32
    w1, w2, w3 = w_ref[0], w_ref[1], w_ref[2]        # (D, D) bf16 each
    b1 = b_ref[0:1, :]                               # (1, D) f32
    b2 = b_ref[1:2, :]
    b3 = b_ref[2:3, :]

    # linear_a1 + LeakyReLU(0.01)
    h = jnp.dot(x.astype(jnp.bfloat16), w1,
                preferred_element_type=jnp.float32) + b1
    h = jnp.maximum(h, 0.01 * h)

    # linear_a2 + LeakyReLU(0.01)
    h = jnp.dot(h.astype(jnp.bfloat16), w2,
                preferred_element_type=jnp.float32) + b2
    h = jnp.maximum(h, 0.01 * h)

    # linear_a3 -> model_out
    logits = jnp.dot(h.astype(jnp.bfloat16), w3,
                     preferred_element_type=jnp.float32) + b3

    # Gumbel perturbation: model_out - log(-log(u)),  u ~ U(0, 1)
    g = logits - jnp.log(-jnp.log(u_ref[...]))

    # Mask zero-padded action columns out of the softmax (they then
    # contribute exp(~-1e30) == 0 to the denominator).
    col = jax.lax.broadcasted_iota(jnp.int32, g.shape, dimension=1)
    g = jnp.where(col < action_size, g, NEG_LARGE)

    m = jnp.max(g, axis=-1, keepdims=True)
    e = jnp.exp(g - m)
    s = jnp.sum(e, axis=-1, keepdims=True)
    out_ref[...] = (e / s).astype(out_ref.dtype)


def openai_actor_forward(x, u, params, *, batch_tile=512):
    """x: (B, num_inputs) f32 observations.
    u: (B, action_size) f32 uniform(0,1) noise (replaces torch.rand_like).
    Returns (B, action_size) f32 policy (softmax probabilities)."""
    w = params["w_packed"]            # (3, D, D) bf16
    b = params["b_packed"]            # (8, D) f32
    D = w.shape[-1]
    action_size = params["action_size"]
    num_inputs = params["num_inputs"]

    B = x.shape[0]
    TB = min(_round_up(B, SUBLANE), batch_tile)
    Bp = _round_up(B, TB)

    # Zero-pad observations; pad noise with 0.5 so padded lanes stay finite.
    xp = jnp.zeros((Bp, D), jnp.float32).at[:B, :num_inputs].set(x)
    up = jnp.full((Bp, D), 0.5, jnp.float32).at[:B, :action_size].set(u)

    flops = 2 * Bp * D * D * 3
    bytes_accessed = xp.size * 4 + up.size * 4 + w.size * 2 + b.size * 4 + Bp * D * 4

    out = pl.pallas_call(
        functools.partial(actor_kernel, action_size=action_size),
        out_shape=jax.ShapeDtypeStruct((Bp, D), jnp.float32),
        grid=(Bp // TB,),
        in_specs=[
            pl.BlockSpec((TB, D), lambda i: (i, 0)),        # x batch tile
            pl.BlockSpec((TB, D), lambda i: (i, 0)),        # noise batch tile
            pl.BlockSpec((3, D, D), lambda i: (0, 0, 0)),   # packed weights (resident)
            pl.BlockSpec((SUBLANE, D), lambda i: (0, 0)),   # packed biases (resident)
        ],
        out_specs=pl.BlockSpec((TB, D), lambda i: (i, 0)),
        compiler_params=pltpu.CompilerParams(
            dimension_semantics=("parallel",)),
        cost_estimate=pl.CostEstimate(
            flops=flops,
            transcendentals=3 * Bp * D,
            bytes_accessed=bytes_accessed),
    )(xp, up, w, b)
    return out[:B, :action_size]


def init_params(key, num_inputs, num_hidden_1, num_hidden_2, action_size):
    """Xavier-uniform weights (leaky_relu gain) + PyTorch-Linear-style biases,
    packed and zero-padded to the 128-lane width for the kernel."""
    D = _round_up(max(num_inputs, num_hidden_1, num_hidden_2, action_size), LANE)
    gain = math.sqrt(2.0 / (1.0 + 0.01 ** 2))   # nn.init.calculate_gain('leaky_relu')
    ks = jax.random.split(key, 6)

    def xavier(k, fan_in, fan_out):
        bound = gain * math.sqrt(6.0 / (fan_in + fan_out))
        return jax.random.uniform(k, (fan_in, fan_out), jnp.float32, -bound, bound)

    def bias(k, fan_in, fan_out):
        bound = 1.0 / math.sqrt(fan_in)
        return jax.random.uniform(k, (1, fan_out), jnp.float32, -bound, bound)

    w1 = xavier(ks[0], num_inputs, num_hidden_1)
    b1 = bias(ks[1], num_inputs, num_hidden_1)
    w2 = xavier(ks[2], num_hidden_1, num_hidden_2)
    b2 = bias(ks[3], num_hidden_1, num_hidden_2)
    w3 = xavier(ks[4], num_hidden_2, action_size)
    b3 = bias(ks[5], num_hidden_2, action_size)

    # Pack weights into one lane-dense (3, D, D) bf16 array.
    w_packed = jnp.zeros((3, D, D), jnp.float32)
    w_packed = w_packed.at[0, :num_inputs, :num_hidden_1].set(w1)
    w_packed = w_packed.at[1, :num_hidden_1, :num_hidden_2].set(w2)
    w_packed = w_packed.at[2, :num_hidden_2, :action_size].set(w3)
    w_packed = w_packed.astype(jnp.bfloat16)

    # Pack biases into one (8, D) f32 tile: rows 0..2 = b1, b2, b3.
    b_packed = jnp.zeros((SUBLANE, D), jnp.float32)
    b_packed = b_packed.at[0, :num_hidden_1].set(b1[0])
    b_packed = b_packed.at[1, :num_hidden_2].set(b2[0])
    b_packed = b_packed.at[2, :action_size].set(b3[0])

    return dict(
        w_packed=w_packed, b_packed=b_packed,
        w1=w1, b1=b1, w2=w2, b2=b2, w3=w3, b3=b3,   # unpadded (for reference)
        num_inputs=num_inputs, action_size=action_size,
    )


def _reference(x, u, p):
    """Pure-JAX reference mirroring the kernel's bf16 matmul inputs."""
    def mm(a, w):
        return jnp.dot(a.astype(jnp.bfloat16), w.astype(jnp.bfloat16),
                       preferred_element_type=jnp.float32)

    lrelu = lambda t: jnp.maximum(t, 0.01 * t)
    h = lrelu(mm(x, p["w1"]) + p["b1"])
    h = lrelu(mm(h, p["w2"]) + p["b2"])
    logits = mm(h, p["w3"]) + p["b3"]
    g = logits - jnp.log(-jnp.log(u))
    return jax.nn.softmax(g, axis=-1)


if __name__ == "__main__":
    # TODO(synk): torch.rand_like's in-module RNG is exposed as an explicit
    # uniform-noise input `u` (generated here with jax.random) so the kernel
    # is reproducible against the reference; an in-kernel pltpu.prng_* path
    # would not be bitwise comparable. Only the `policy` output is returned
    # (the model_original_out=True path additionally returns raw logits).
    B, num_inputs, h1, h2, action_size = 8, 32, 64, 64, 16

    key = jax.random.PRNGKey(0)
    kx, ku, kp = jax.random.split(key, 3)
    x = jax.random.normal(kx, (B, num_inputs), jnp.float32)
    u = jax.random.uniform(ku, (B, action_size), jnp.float32,
                           minval=1e-6, maxval=1.0)
    params = init_params(kp, num_inputs, h1, h2, action_size)

    policy = openai_actor_forward(x, u, params)
    policy = jax.block_until_ready(policy)

    ref = _reference(x, u, params)
    assert policy.shape == (B, action_size)
    assert jnp.allclose(jnp.sum(policy, axis=-1), 1.0, atol=1e-4), "rows not normalized"
    assert jnp.allclose(policy, ref, atol=1e-3, rtol=1e-3), "mismatch vs reference"

    print("KERNEL_OK")
</pallas_src>

<mosaic_0001>
module attributes {stable_mosaic.version = 11 : i64} {
  func.func @actor_kernel(%arg0: i32, %arg1: memref<8x128xf32, #tpu.memory_space<vmem>>, %arg2: memref<8x128xf32, #tpu.memory_space<vmem>>, %arg3: memref<3x128x128xbf16, #tpu.memory_space<vmem>>, %arg4: memref<8x128xf32, #tpu.memory_space<vmem>>, %arg5: memref<8x128xf32, #tpu.memory_space<vmem>>) attributes {dimension_semantics = [#tpu.dimension_semantics<parallel>], iteration_bounds = array<i64: 1>, scalar_prefetch = 0 : i64, scratch_operands = 0 : i64, tpu.core_type = #tpu.core_type<tc>, window_params = [{transform_indices = @transform_0, window_bounds = array<i64: 8, 128>}, {transform_indices = @transform_1, window_bounds = array<i64: 8, 128>}, {pipeline_mode = #tpu.pipeline_mode<synchronous>, transform_indices = @transform_2, window_bounds = array<i64: 3, 128, 128>}, {pipeline_mode = #tpu.pipeline_mode<synchronous>, transform_indices = @transform_3, window_bounds = array<i64: 8, 128>}, {transform_indices = @transform_4, window_bounds = array<i64: 8, 128>}]} {
    %c0 = arith.constant 0 : index
    %c0_0 = arith.constant 0 : index
    %0 = vector.load %arg1[%c0, %c0_0] : memref<8x128xf32, #tpu.memory_space<vmem>>, vector<8x128xf32>
    %c0_1 = arith.constant 0 : index
    %c0_2 = arith.constant 0 : index
    %c0_3 = arith.constant 0 : index
    %1 = vector.load %arg3[%c0_1, %c0_2, %c0_3] : memref<3x128x128xbf16, #tpu.memory_space<vmem>>, vector<1x128x128xbf16>
    %2 = vector.shape_cast %1 : vector<1x128x128xbf16> to vector<128x128xbf16>
    %c1 = arith.constant 1 : index
    %c0_4 = arith.constant 0 : index
    %c0_5 = arith.constant 0 : index
    %3 = vector.load %arg3[%c1, %c0_4, %c0_5] : memref<3x128x128xbf16, #tpu.memory_space<vmem>>, vector<1x128x128xbf16>
    %4 = vector.shape_cast %3 : vector<1x128x128xbf16> to vector<128x128xbf16>
    %c2 = arith.constant 2 : index
    %c0_6 = arith.constant 0 : index
    %c0_7 = arith.constant 0 : index
    %5 = vector.load %arg3[%c2, %c0_6, %c0_7] : memref<3x128x128xbf16, #tpu.memory_space<vmem>>, vector<1x128x128xbf16>
    %6 = vector.shape_cast %5 : vector<1x128x128xbf16> to vector<128x128xbf16>
    %c0_8 = arith.constant 0 : index
    %c0_9 = arith.constant 0 : index
    %7 = vector.load %arg4[%c0_8, %c0_9] : memref<8x128xf32, #tpu.memory_space<vmem>>, vector<1x128xf32>
    %c1_10 = arith.constant 1 : index
    %c0_11 = arith.constant 0 : index
    %8 = vector.load %arg4[%c1_10, %c0_11] : memref<8x128xf32, #tpu.memory_space<vmem>>, vector<1x128xf32>
    %c2_12 = arith.constant 2 : index
    %c0_13 = arith.constant 0 : index
    %9 = vector.load %arg4[%c2_12, %c0_13] : memref<8x128xf32, #tpu.memory_space<vmem>>, vector<1x128xf32>
    %10 = arith.truncf %0 : vector<8x128xf32> to vector<8x128xbf16>
    %cst = arith.constant dense<0.000000e+00> : vector<8x128xf32>
    %11 = tpu.matmul %10, %2, %cst {dimension_numbers = #tpu.dot_dimension_numbers<[1], [0], [0], [1], [0, 0, 1, 1], [], []>} : vector<8x128xbf16>, vector<128x128xbf16>, vector<8x128xf32> -> vector<8x128xf32>
    %12 = vector.broadcast %7 : vector<1x128xf32> to vector<8x128xf32>
    %13 = arith.addf %11, %12 : vector<8x128xf32>
    %cst_14 = arith.constant 0.00999999977 : f32
    %14 = vector.broadcast %cst_14 : f32 to vector<8x128xf32>
    %15 = arith.mulf %14, %13 : vector<8x128xf32>
    %16 = arith.maximumf %13, %15 : vector<8x128xf32>
    %17 = arith.truncf %16 : vector<8x128xf32> to vector<8x128xbf16>
    %cst_15 = arith.constant dense<0.000000e+00> : vector<8x128xf32>
    %18 = tpu.matmul %17, %4, %cst_15 {dimension_numbers = #tpu.dot_dimension_numbers<[1], [0], [0], [1], [0, 0, 1, 1], [], []>} : vector<8x128xbf16>, vector<128x128xbf16>, vector<8x128xf32> -> vector<8x128xf32>
    %19 = vector.broadcast %8 : vector<1x128xf32> to vector<8x128xf32>
    %20 = arith.addf %18, %19 : vector<8x128xf32>
    %cst_16 = arith.constant 0.00999999977 : f32
    %21 = vector.broadcast %cst_16 : f32 to vector<8x128xf32>
    %22 = arith.mulf %21, %20 : vector<8x128xf32>
    %23 = arith.maximumf %20, %22 : vector<8x128xf32>
    %24 = arith.truncf %23 : vector<8x128xf32> to vector<8x128xbf16>
    %cst_17 = arith.constant dense<0.000000e+00> : vector<8x128xf32>
    %25 = tpu.matmul %24, %6, %cst_17 {dimension_numbers = #tpu.dot_dimension_numbers<[1], [0], [0], [1], [0, 0, 1, 1], [], []>} : vector<8x128xbf16>, vector<128x128xbf16>, vector<8x128xf32> -> vector<8x128xf32>
    %26 = vector.broadcast %9 : vector<1x128xf32> to vector<8x128xf32>
    %27 = arith.addf %25, %26 : vector<8x128xf32>
    %c0_18 = arith.constant 0 : index
    %c0_19 = arith.constant 0 : index
    %28 = vector.load %arg2[%c0_18, %c0_19] : memref<8x128xf32, #tpu.memory_space<vmem>>, vector<8x128xf32>
    %29 = math.log %28 : vector<8x128xf32>
    %cst_20 = arith.constant 0.000000e+00 : f32
    %30 = vector.broadcast %cst_20 : f32 to vector<8x128xf32>
    %31 = arith.subf %30, %29 : vector<8x128xf32>
    %32 = math.log %31 : vector<8x128xf32>
    %33 = arith.subf %27, %32 : vector<8x128xf32>
    %34 = tpu.iota {dimensions = array<i32: 1>} : vector<8x128xi32>
    %c16_i32 = arith.constant 16 : i32
    %35 = vector.broadcast %c16_i32 : i32 to vector<8x128xi32>
    %36 = arith.cmpi slt, %34, %35 : vector<8x128xi32>
    %cst_21 = arith.constant -1.000000e+30 : f32
    %37 = vector.broadcast %cst_21 : f32 to vector<8x128xf32>
    %38 = arith.select %36, %33, %37 : vector<8x128xi1>, vector<8x128xf32>
    %cst_22 = arith.constant dense<0xFF800000> : vector<8xf32>
    %39 = vector.multi_reduction <maximumf>, %38, %cst_22 [1] : vector<8x128xf32> to vector<8xf32>
    %40 = vector.shape_cast %39 : vector<8xf32> to vector<8x1xf32>
    %41 = vector.broadcast %40 : vector<8x1xf32> to vector<8x128xf32>
    %42 = arith.subf %38, %41 : vector<8x128xf32>
    %43 = math.exp %42 : vector<8x128xf32>
    %cst_23 = arith.constant dense<0.000000e+00> : vector<8xf32>
    %44 = vector.multi_reduction <add>, %43, %cst_23 [1] : vector<8x128xf32> to vector<8xf32>
    %45 = vector.shape_cast %44 : vector<8xf32> to vector<8x1xf32>
    %46 = vector.broadcast %45 : vector<8x1xf32> to vector<8x128xf32>
    %47 = arith.divf %43, %46 : vector<8x128xf32>
    %c0_24 = arith.constant 0 : index
    %c0_25 = arith.constant 0 : index
    %48 = vector.load %arg5[%c0_24, %c0_25] : memref<8x128xf32, #tpu.memory_space<vmem>>, vector<8x128xf32>
    tpu.vector_store %arg5[%c0_24, %c0_25], %47 {strides = array<i32>} : memref<8x128xf32, #tpu.memory_space<vmem>>, vector<8x128xf32>,
    return
  }
  func.func @transform_0(%arg0: i32) -> (i32, i32) {
    %c0_i32 = arith.constant 0 : i32
    %c0_i32_0 = arith.constant 0 : i32
    return %arg0, %c0_i32 : i32, i32
  }
  func.func @transform_1(%arg0: i32) -> (i32, i32) {
    %c0_i32 = arith.constant 0 : i32
    %c0_i32_0 = arith.constant 0 : i32
    return %arg0, %c0_i32 : i32, i32
  }
  func.func @transform_2(%arg0: i32) -> (i32, i32, i32) {
    %c0_i32 = arith.constant 0 : i32
    %c0_i32_0 = arith.constant 0 : i32
    %c0_i32_1 = arith.constant 0 : i32
    %c0_i32_2 = arith.constant 0 : i32
    return %c0_i32, %c0_i32_0, %c0_i32_1 : i32, i32, i32
  }
  func.func @transform_3(%arg0: i32) -> (i32, i32) {
    %c0_i32 = arith.constant 0 : i32
    %c0_i32_0 = arith.constant 0 : i32
    %c0_i32_1 = arith.constant 0 : i32
    return %c0_i32, %c0_i32_0 : i32, i32
  }
  func.func @transform_4(%arg0: i32) -> (i32, i32) {
    %c0_i32 = arith.constant 0 : i32
    %c0_i32_0 = arith.constant 0 : i32
    return %arg0, %c0_i32 : i32, i32
  }
}

</mosaic_0001>

<llo_original>
// kernel: tpu_custom_call.1
$region0: #{tpu_custom_call.1}
  #allocation0 [shape = 'u32[]', space=smem, size = 0x4, offset = 0x4, fixed_abs, tag = 'smem constant byte address 0x4 - core index']
  #allocation1 [shape = 'u32[72,128]{1,0:T(1,128)}', space=vmem, size = 0x9000, scoped, tag = 'internal scratch']
  %s0 = inlined_call_operand.hbm [shape: f32[8,128], index: 0, kind: input, shape index: {}]
  %s1 = inlined_call_operand.hbm [shape: f32[8,128], index: 1, kind: input, shape index: {}]
  %s2 = inlined_call_operand.hbm [shape: bf16[3,128,128], index: 2, kind: input, shape index: {}]
  %s3 = inlined_call_operand.hbm [shape: f32[8,128], index: 3, kind: input, shape index: {}]
  %s4 = inlined_call_operand.hbm [shape: f32[8,128], index: 4, kind: output, shape index: {}]
  %s5 = sld [smem:[#allocation0]]
  $region42: #{tpu_custom_call.1} parent=0
    _
  %s7 = ssub.s32 1, %s5
  %s8 = scalar_select 0, %s7, %s5
  $region1: #{tpu_custom_call.1} parent=0
    #allocation2 [shape = 'u8[4096]{0}', space=vmem, size = 0x1000, scoped, tag = 'input window, operand 0, single buffered']
    #allocation3 [shape = 's32[1]{0}', space=sflag, size = 0x4, scoped, tag = 'scoped memory for tpu_custom_call.1']
    #allocation4 [shape = 's32[1]{0}', space=sflag, size = 0x4, scoped, tag = 'scoped memory for tpu_custom_call.1']
    #allocation5 [shape = 'u8[4096]{0}', space=vmem, size = 0x1000, scoped, tag = 'input window, operand 1, single buffered']
    #allocation6 [shape = 's32[1]{0}', space=sflag, size = 0x4, scoped, tag = 'scoped memory for tpu_custom_call.1']
    #allocation7 [shape = 'u8[98304]{0}', space=vmem, size = 0x18000, scoped, tag = 'input window, operand 2, single buffered']
    #allocation8 [shape = 'u8[4096]{0}', space=vmem, size = 0x1000, scoped, tag = 'input window, operand 3, single buffered']
    #allocation9 [shape = 's32[1]{0}', space=sflag, size = 0x4, scoped, tag = 'scoped memory for tpu_custom_call.1']
    #allocation10 [shape = 'u8[4096]{0}', space=vmem, size = 0x1000, scoped, tag = 'output window, operand 0, single buffered']
    %9 = vsyncpa [#allocation3], 0
    %10 = vsyncpa [#allocation6], 0
    %11 = vsyncpa [#allocation9], 0
    %12 = vsyncpa [#allocation4], 0
    // Predicated region
    $region2: #{tpu_custom_call.1} parent=1 // pred_check
      _
    $region3: #{tpu_custom_call.1} parent=1 // pred_check_branch
      %14 = sbr.rel (0) target = $region5
    $region4: #{tpu_custom_call.1} parent=1 // pred_region
      %16 = vsyncadd [#allocation3], 0
      %s18 = sshll.u32 %s0, 4
      %s19 = int_to_ptr.hbm [resolvable:$true] %s18
      %s20 = sshll.u32 [#allocation2], 4
      %s21 = int_to_ptr.vmem [resolvable:$true] %s20
      %23 = dma.hbm_to_vmem [thread:$0]  %s19, 128, %s21, [#allocation3]
    $region5: #{tpu_custom_call.1} parent=1 // pred_fallthru
      _
    // Predicated region
    $region6: #{tpu_custom_call.1} parent=1 // pred_check
      _
    $region7: #{tpu_custom_call.1} parent=1 // pred_check_branch
      %25 = sbr.rel (0) target = $region9
    $region8: #{tpu_custom_call.1} parent=1 // pred_region
      %27 = vsyncadd [#allocation6], 0
      %s29 = sshll.u32 %s1, 4
      %s30 = int_to_ptr.hbm [resolvable:$true] %s29
      %s31 = sshll.u32 [#allocation5], 4
      %s32 = int_to_ptr.vmem [resolvable:$true] %s31
      %34 = dma.hbm_to_vmem [thread:$0]  %s30, 128, %s32, [#allocation6]
    $region9: #{tpu_custom_call.1} parent=1 // pred_fallthru
      _
    // Predicated region
    $region10: #{tpu_custom_call.1} parent=1 // pred_check
      _
    $region11: #{tpu_custom_call.1} parent=1 // pred_check_branch
      %36 = sbr.rel (0) target = $region13
    $region12: #{tpu_custom_call.1} parent=1 // pred_region
      %38 = vsyncadd [#allocation6], 0
      %s39 = sshll.u32 %s2, 4
      %s40 = int_to_ptr.hbm [resolvable:$true] %s39
      %s41 = sshll.u32 [#allocation7], 4
      %s42 = int_to_ptr.vmem [resolvable:$true] %s41
      %47 = dma.hbm_to_vmem [thread:$0]  %s40, 3072, %s42, [#allocation6], 64, 64, 4
    $region13: #{tpu_custom_call.1} parent=1 // pred_fallthru
      _
    // Predicated region
    $region14: #{tpu_custom_call.1} parent=1 // pred_check
      _
    $region15: #{tpu_custom_call.1} parent=1 // pred_check_branch
      %49 = sbr.rel (0) target = $region17
    $region16: #{tpu_custom_call.1} parent=1 // pred_region
      %51 = vsyncadd [#allocation9], 0
      %s53 = sshll.u32 %s3, 4
      %s54 = int_to_ptr.hbm [resolvable:$true] %s53
      %s55 = sshll.u32 [#allocation8], 4
      %s56 = int_to_ptr.vmem [resolvable:$true] %s55
      %58 = dma.hbm_to_vmem [thread:$0]  %s54, 128, %s56, [#allocation9]
    $region17: #{tpu_custom_call.1} parent=1 // pred_fallthru
      _
    // Predicated region
    $region18: #{tpu_custom_call.1} parent=1 // pred_check
      _
    $region19: #{tpu_custom_call.1} parent=1 // pred_check_branch
      %60 = sbr.rel (0) target = $region21
    $region20: #{tpu_custom_call.1} parent=1 // pred_region
      %62 = dma.done [#allocation3], 128
    $region21: #{tpu_custom_call.1} parent=1 // pred_fallthru
      _
    // Predicated region
    $region22: #{tpu_custom_call.1} parent=1 // pred_check
      _
    $region23: #{tpu_custom_call.1} parent=1 // pred_check_branch
      %64 = sbr.rel (0) target = $region25
    $region24: #{tpu_custom_call.1} parent=1 // pred_region
      %66 = dma.done [#allocation6], 128
    $region25: #{tpu_custom_call.1} parent=1 // pred_fallthru
      _
    // Predicated region
    $region26: #{tpu_custom_call.1} parent=1 // pred_check
      _
    $region27: #{tpu_custom_call.1} parent=1 // pred_check_branch
      %68 = sbr.rel (0) target = $region29
    $region28: #{tpu_custom_call.1} parent=1 // pred_region
      %70 = dma.done [#allocation6], 3072
    $region29: #{tpu_custom_call.1} parent=1 // pred_fallthru
      _
    // Predicated region
    $region30: #{tpu_custom_call.1} parent=1 // pred_check
      _
    $region31: #{tpu_custom_call.1} parent=1 // pred_check_branch
      %72 = sbr.rel (0) target = $region33
    $region32: #{tpu_custom_call.1} parent=1 // pred_region
      %74 = dma.done [#allocation9], 128
    $region33: #{tpu_custom_call.1} parent=1 // pred_fallthru
      _
    %v75 = vld [vmem:[#allocation2] sm:$0xff]
    %v76 = vld [vmem:[#allocation7] sm:$0xf]
    %v77 = vld [vmem:[#allocation7 + $0x4] sm:$0xf]
    %v78 = vld [vmem:[#allocation7 + $0x8] sm:$0xf]
    %v79 = vld [vmem:[#allocation7 + $0xc] sm:$0xf]
    %v80 = vld [vmem:[#allocation7 + $0x10] sm:$0xf]
    %v81 = vld [vmem:[#allocation7 + $0x14] sm:$0xf]
    %v82 = vld [vmem:[#allocation7 + $0x18] sm:$0xf]
    %v83 = vld [vmem:[#allocation7 + $0x1c] sm:$0xf]
    %v84 = vld [vmem:[#allocation7 + $0x20] sm:$0xf]
    %v85 = vld [vmem:[#allocation7 + $0x24] sm:$0xf]
    %v86 = vld [vmem:[#allocation7 + $0x28] sm:$0xf]
    %v87 = vld [vmem:[#allocation7 + $0x2c] sm:$0xf]
    %v88 = vld [vmem:[#allocation7 + $0x30] sm:$0xf]
    %v89 = vld [vmem:[#allocation7 + $0x34] sm:$0xf]
    %v90 = vld [vmem:[#allocation7 + $0x38] sm:$0xf]
    %v91 = vld [vmem:[#allocation7 + $0x3c] sm:$0xf]
    %s92 = scalar_lea.vmem [#allocation7], 64
    %v93 = vld [vmem:[%s92] sm:$0xf]
    %v94 = vld [vmem:[%s92 + $0x4] sm:$0xf]
    %v95 = vld [vmem:[%s92 + $0x8] sm:$0xf]
    %v96 = vld [vmem:[%s92 + $0xc] sm:$0xf]
    %v97 = vld [vmem:[%s92 + $0x10] sm:$0xf]
    %v98 = vld [vmem:[%s92 + $0x14] sm:$0xf]
    %v99 = vld [vmem:[%s92 + $0x18] sm:$0xf]
    %v100 = vld [vmem:[%s92 + $0x1c] sm:$0xf]
    %v101 = vld [vmem:[%s92 + $0x20] sm:$0xf]
    %v102 = vld [vmem:[%s92 + $0x24] sm:$0xf]
    %v103 = vld [vmem:[%s92 + $0x28] sm:$0xf]
    %v104 = vld [vmem:[%s92 + $0x2c] sm:$0xf]
    %v105 = vld [vmem:[%s92 + $0x30] sm:$0xf]
    %v106 = vld [vmem:[%s92 + $0x34] sm:$0xf]
    %v107 = vld [vmem:[%s92 + $0x38] sm:$0xf]
    %v108 = vld [vmem:[%s92 + $0x3c] sm:$0xf]
    %s109 = scalar_lea.vmem [#allocation7], 128
    %v110 = vld [vmem:[%s109] sm:$0xf]
    %v111 = vld [vmem:[%s109 + $0x4] sm:$0xf]
    %v112 = vld [vmem:[%s109 + $0x8] sm:$0xf]
    %v113 = vld [vmem:[%s109 + $0xc] sm:$0xf]
    %v114 = vld [vmem:[%s109 + $0x10] sm:$0xf]
    %v115 = vld [vmem:[%s109 + $0x14] sm:$0xf]
    %v116 = vld [vmem:[%s109 + $0x18] sm:$0xf]
    %v117 = vld [vmem:[%s109 + $0x1c] sm:$0xf]
    %v118 = vld [vmem:[%s109 + $0x20] sm:$0xf]
    %v119 = vld [vmem:[%s109 + $0x24] sm:$0xf]
    %v120 = vld [vmem:[%s109 + $0x28] sm:$0xf]
    %v121 = vld [vmem:[%s109 + $0x2c] sm:$0xf]
    %v122 = vld [vmem:[%s109 + $0x30] sm:$0xf]
    %v123 = vld [vmem:[%s109 + $0x34] sm:$0xf]
    %v124 = vld [vmem:[%s109 + $0x38] sm:$0xf]
    %v125 = vld [vmem:[%s109 + $0x3c] sm:$0xf]
    %v126 = vld [vmem:[#allocation8] sm:$0x1]
    %v127 = vld [vmem:[#allocation8 + $0x1] sm:$0x1]
    %v128 = vld [vmem:[#allocation8 + $0x2] sm:$0x1]
    %v129 = vpack.c.bf16 %v75, %v75
    %v130 = vperm.slane %v126, 0
    %v147 = vunpack.c.l.b16 %v76
    %v148 = vunpack.c.l.b16 %v77
    %v149 = vunpack.c.l.b16 %v78
    %v150 = vunpack.c.l.b16 %v79
    %v151 = vunpack.c.l.b16 %v80
    %v152 = vunpack.c.l.b16 %v81
    %v153 = vunpack.c.l.b16 %v82
    %v154 = vunpack.c.l.b16 %v83
    %v155 = vunpack.c.l.b16 %v84
    %v156 = vunpack.c.l.b16 %v85
    %v157 = vunpack.c.l.b16 %v86
    %v158 = vunpack.c.l.b16 %v87
    %v159 = vunpack.c.l.b16 %v88
    %v160 = vunpack.c.l.b16 %v89
    %v161 = vunpack.c.l.b16 %v90
    %v162 = vunpack.c.l.b16 %v91
    %v163 = vpack.c.b16 %v148, %v147
    %v164 = vpack.c.b16 %v150, %v149
    %v165 = vpack.c.b16 %v152, %v151
    %v166 = vpack.c.b16 %v154, %v153
    %v167 = vpack.c.b16 %v156, %v155
    %v168 = vpack.c.b16 %v158, %v157
    %v169 = vpack.c.b16 %v160, %v159
    %v170 = vpack.c.b16 %v162, %v161
    %179 = vmatpush.bf16.msra.mxu0 %v170
    %180 = vmatpush.bf16.msra.mxu0 %v169
    %181 = vmatpush.bf16.msra.mxu0 %v168
    %182 = vmatpush.bf16.msra.mxu0 %v167
    %183 = vmatpush.bf16.msra.mxu0 %v166
    %184 = vmatpush.bf16.msra.mxu0 %v165
    %185 = vmatpush.bf16.msra.mxu0 %v164
    %186 = vmatpush.bf16.msra.mxu0 %v163
    %187 = vmatmul.bf16.gmra.mxu0 %v129
    %v188 = vpop.f32.mrf.mxu0
    %v189 = vadd.f32 %v130, %v188
    %v190 = vpop.f32.mrf.mxu0
    %191 = vdwg.mxu0
    %v192 = vmul.f32 %v189, 0.01
    %v193 = vmax.f32 %v189, %v192
    %v194 = vpack.c.bf16 %v193, %v193
    %v195 = vperm.slane %v127, 0
    %v212 = vunpack.c.l.b16 %v93
    %v213 = vunpack.c.l.b16 %v94
    %v214 = vunpack.c.l.b16 %v95
    %v215 = vunpack.c.l.b16 %v96
    %v216 = vunpack.c.l.b16 %v97
    %v217 = vunpack.c.l.b16 %v98
    %v218 = vunpack.c.l.b16 %v99
    %v219 = vunpack.c.l.b16 %v100
    %v220 = vunpack.c.l.b16 %v101
    %v221 = vunpack.c.l.b16 %v102
    %v222 = vunpack.c.l.b16 %v103
    %v223 = vunpack.c.l.b16 %v104
    %v224 = vunpack.c.l.b16 %v105
    %v225 = vunpack.c.l.b16 %v106
    %v226 = vunpack.c.l.b16 %v107
    %v227 = vunpack.c.l.b16 %v108
    %v228 = vpack.c.b16 %v213, %v212
    %v229 = vpack.c.b16 %v215, %v214
    %v230 = vpack.c.b16 %v217, %v216
    %v231 = vpack.c.b16 %v219, %v218
    %v232 = vpack.c.b16 %v221, %v220
    %v233 = vpack.c.b16 %v223, %v222
    %v234 = vpack.c.b16 %v225, %v224
    %v235 = vpack.c.b16 %v227, %v226
    %244 = vmatpush.bf16.msra.mxu0 %v235
    %245 = vmatpush.bf16.msra.mxu0 %v234
    %246 = vmatpush.bf16.msra.mxu0 %v233
    %247 = vmatpush.bf16.msra.mxu0 %v232
    %248 = vmatpush.bf16.msra.mxu0 %v231
    %249 = vmatpush.bf16.msra.mxu0 %v230
    %250 = vmatpush.bf16.msra.mxu0 %v229
    %251 = vmatpush.bf16.msra.mxu0 %v228
    %252 = vmatmul.bf16.gmra.mxu0 %v194
    %v253 = vpop.f32.mrf.mxu0
    %v254 = vadd.f32 %v195, %v253
    %v255 = vpop.f32.mrf.mxu0
    %256 = vdwg.mxu0
    %v257 = vmul.f32 %v254, 0.01
    %v258 = vmax.f32 %v254, %v257
    %v259 = vpack.c.bf16 %v258, %v258
    %v260 = vperm.slane %v128, 0
    %v277 = vunpack.c.l.b16 %v110
    %v278 = vunpack.c.l.b16 %v111
    %v279 = vunpack.c.l.b16 %v112
    %v280 = vunpack.c.l.b16 %v113
    %v281 = vunpack.c.l.b16 %v114
    %v282 = vunpack.c.l.b16 %v115
    %v283 = vunpack.c.l.b16 %v116
    %v284 = vunpack.c.l.b16 %v117
    %v285 = vunpack.c.l.b16 %v118
    %v286 = vunpack.c.l.b16 %v119
    %v287 = vunpack.c.l.b16 %v120
    %v288 = vunpack.c.l.b16 %v121
    %v289 = vunpack.c.l.b16 %v122
    %v290 = vunpack.c.l.b16 %v123
    %v291 = vunpack.c.l.b16 %v124
    %v292 = vunpack.c.l.b16 %v125
    %v293 = vpack.c.b16 %v278, %v277
    %v294 = vpack.c.b16 %v280, %v279
    %v295 = vpack.c.b16 %v282, %v281
    %v296 = vpack.c.b16 %v284, %v283
    %v297 = vpack.c.b16 %v286, %v285
    %v298 = vpack.c.b16 %v288, %v287
    %v299 = vpack.c.b16 %v290, %v289
    %v300 = vpack.c.b16 %v292, %v291
    %309 = vmatpush.bf16.msra.mxu0 %v300
    %310 = vmatpush.bf16.msra.mxu0 %v299
    %311 = vmatpush.bf16.msra.mxu0 %v298
    %312 = vmatpush.bf16.msra.mxu0 %v297
    %313 = vmatpush.bf16.msra.mxu0 %v296
    %314 = vmatpush.bf16.msra.mxu0 %v295
    %315 = vmatpush.bf16.msra.mxu0 %v294
    %316 = vmatpush.bf16.msra.mxu0 %v293
    %317 = vmatmul.bf16.gmra.mxu0 %v259
    %v318 = vpop.f32.mrf.mxu0
    %v319 = vadd.f32 %v260, %v318
    %v320 = vpop.f32.mrf.mxu0
    %321 = vdwg.mxu0
    %v322 = vld [vmem:[#allocation5] sm:$0xff]
    %v323 = vlog2.pop %v322
    %v324 = vmul.f32 %v323, 0.6931472
    %v325 = vsub.f32 0.0, %v324
    %v326 = vlog2.pop %v325
    %v327 = vmul.f32 %v326, 0.6931472
    %v328 = vsub.f32 %v319, %v327
    %v329 = vlaneseq
    %v330 = vand.u32 %v329, 127
    %vm331 = vcmp.lt.s32.totalorder %v330, 16
    %v332 = vsel %vm331, %v328, -1e+30
    %333 = vmax.xlane.f32.xlu0 %v332
    %v334 = vpop.xlane.xlu0 %333
    %v335 = vsub.f32 %v332, %v334
    %v336 = vmul.f32 %v335, 1.442695
    %v337 = vpow.pop %v336
    %338 = vadd.xlane.f32.xlu0 %v337
    %v339 = vpop.xlane.xlu0 %338
    %v340 = vrcp.pop %v339
    %v341 = vmul.f32 %v339, %v340
    %v342 = vsub.f32 1.0, %v341
    %v343 = vmul.f32 %v340, %v342
    %v344 = vadd.f32 %v340, %v343
    %vm345 = vweird.f32 %v339
    %vm346 = vweird.f32 %v340
    %vm347 = vmor %vm345, %vm346
    %v348 = vsel %vm347, %v340, %v344
    %v349 = vand.u32 2147483647, %v339
    %vm350 = vcmp.eq.f32.partialorder %v349, 8.507059e+37
    %v351 = vand.u32 %v339, 2147483648
    %v352 = vor.u32 1.1754944e-38, %v351
    %v353 = vsel %vm350, %v352, %v348
    %v354 = vmul.f32 %v337, %v353
    %355 = vst [vmem:[#allocation10] sm:$0xff] %v354
    // Predicated region
    $region34: #{tpu_custom_call.1} parent=1 // pred_check
      _
    $region35: #{tpu_custom_call.1} parent=1 // pred_check_branch
      %357 = sbr.rel (0) target = $region37
    $region36: #{tpu_custom_call.1} parent=1 // pred_region
      %359 = vsyncadd [#allocation4], 0
      %s361 = sshll.u32 [#allocation10], 4
      %s362 = int_to_ptr.vmem [resolvable:$true] %s361
      %s363 = sshll.u32 %s4, 4
      %s364 = int_to_ptr.hbm [resolvable:$true] %s363
      %366 = dma.vmem_to_hbm [thread:$0]  %s362, 128, %s364, [#allocation4]
    $region37: #{tpu_custom_call.1} parent=1 // pred_fallthru
      _
    // Predicated region
    $region38: #{tpu_custom_call.1} parent=1 // pred_check
      _
    $region39: #{tpu_custom_call.1} parent=1 // pred_check_branch
      %368 = sbr.rel (0) target = $region41
    $region40: #{tpu_custom_call.1} parent=1 // pred_region
      %370 = dma.done [#allocation4], 128
    $region41: #{tpu_custom_call.1} parent=1 // pred_fallthru
      _
    %371 = vsyncpa [#allocation3], 1
    %372 = vsyncpa [#allocation6], 1
    %373 = vsyncpa [#allocation9], 1
    %374 = vsyncpa [#allocation4], 1

</llo_original>
